<compile_context>
chip_gen: v6e
topology: v6e:2x2x1
jax: 0.10.0
libtpu: 0.0.40
codegen_flags: <defaults>
</compile_context>

<pallas_src>
import math
import functools

import jax
import jax.numpy as jnp
from jax.experimental import pallas as pl
from jax.experimental.pallas import tpu as pltpu


def _mhsa_kernel(x_ref, wqkv_ref, bqkv_ref, wout_ref, bout_ref, o_ref,
                 qkv_scratch, acc_scratch,
                 *, num_heads, head_dim, embed_dim):
    # One grid step == one batch element. All of N and C are resident in VMEM.
    x = x_ref[0]                                                   # (N, C) bf16

    # QKV projection on the MXU (bf16 x bf16 -> f32), staged in a VMEM scratch.
    qkv_scratch[...] = (
        jnp.dot(x, wqkv_ref[...], preferred_element_type=jnp.float32)
        + bqkv_ref[...]                                            # (1, 3C) f32, one broadcast
    )

    # f32 accumulator for the fused output projection (replaces the concat).
    acc_scratch[...] = jnp.zeros_like(acc_scratch)

    scale = 1.0 / math.sqrt(head_dim)
    for h in range(num_heads):                                     # static unroll over heads
        lo = h * head_dim
        # Fold the attention scale into q before the matmul.
        q = (qkv_scratch[:, lo:lo + head_dim] * scale).astype(jnp.bfloat16)          # (N, Dh)
        k = qkv_scratch[:, embed_dim + lo:embed_dim + lo + head_dim].astype(jnp.bfloat16)
        v = qkv_scratch[:, 2 * embed_dim + lo:2 * embed_dim + lo + head_dim].astype(jnp.bfloat16)

        # q @ k^T without materializing a transpose: contract last dim of both.
        s = jax.lax.dot_general(q, k, (((1,), (1,)), ((), ())),
                                preferred_element_type=jnp.float32)  # (N, N) f32

        # Numerically-stable softmax in f32; reciprocal on the EUP.
        s = s - jnp.max(s, axis=-1, keepdims=True)
        p = jnp.exp(s)
        p = p * pl.reciprocal(jnp.sum(p, axis=-1, keepdims=True), approx=True)

        head_out = jnp.dot(p.astype(jnp.bfloat16), v,
                           preferred_element_type=jnp.float32)       # (N, Dh) f32

        # Fused output projection for this head: accumulate into (N, C) directly,
        # slicing only the Dh rows of W_out^T this head touches.
        acc_scratch[...] += jnp.dot(
            head_out.astype(jnp.bfloat16),
            wout_ref[pl.ds(lo, head_dim), :],
            preferred_element_type=jnp.float32)

    o_ref[0] = (acc_scratch[...] + bout_ref[...]).astype(o_ref.dtype)


def mhsa_pallas(x, w_qkv, b_qkv, w_out, b_out, num_heads):
    """x: (B, N, C). w_qkv: (3C, C), b_qkv: (3C,), w_out: (C, C), b_out: (C,)
    (PyTorch nn.Linear parameter shapes). Output dtype matches x."""
    B, N, C = x.shape
    head_dim = C // num_heads

    # bf16 operands for the MXU; biases / accumulators stay f32.
    x_bf = x.astype(jnp.bfloat16)
    wqkv_t = jnp.transpose(w_qkv).astype(jnp.bfloat16)   # (C, 3C)
    wout_t = jnp.transpose(w_out).astype(jnp.bfloat16)   # (C, C)
    bqkv_2d = b_qkv.reshape(1, 3 * C).astype(jnp.float32)
    bout_2d = b_out.reshape(1, C).astype(jnp.float32)

    kernel = functools.partial(
        _mhsa_kernel, num_heads=num_heads, head_dim=head_dim, embed_dim=C)

    return pl.pallas_call(
        kernel,
        out_shape=jax.ShapeDtypeStruct((B, N, C), x.dtype),
        grid_spec=pltpu.PrefetchScalarGridSpec(
            num_scalar_prefetch=0,
            grid=(B,),
            in_specs=[
                pl.BlockSpec((1, N, C), lambda b: (b, 0, 0)),       # x, one batch per step
                pl.BlockSpec((C, 3 * C), lambda b: (0, 0)),         # W_qkv^T (grid-invariant)
                pl.BlockSpec((1, 3 * C), lambda b: (0, 0)),         # b_qkv
                pl.BlockSpec((C, C), lambda b: (0, 0)),             # W_out^T (grid-invariant)
                pl.BlockSpec((1, C), lambda b: (0, 0)),             # b_out
            ],
            out_specs=pl.BlockSpec((1, N, C), lambda b: (b, 0, 0)),
            scratch_shapes=[
                pltpu.VMEM((N, 3 * C), jnp.float32),   # staged qkv
                pltpu.VMEM((N, C), jnp.float32),       # fused out-projection accumulator
            ],
        ),
        compiler_params=pltpu.CompilerParams(
            dimension_semantics=("parallel",),
            vmem_limit_bytes=32 * 1024 * 1024,
        ),
    )(x_bf, wqkv_t, bqkv_2d, wout_t, bout_2d)


def mhsa_reference(x, w_qkv, b_qkv, w_out, b_out, num_heads):
    """Pure-JAX (f32) replica of the PyTorch forward, for verification."""
    B, N, C = x.shape
    head_dim = C // num_heads
    qkv = jnp.einsum("bnc,oc->bno", x, w_qkv) + b_qkv            # (B, N, 3C)
    qkv = qkv.reshape(B, N, 3, num_heads, head_dim)
    qkv = jnp.transpose(qkv, (2, 0, 3, 1, 4))                    # (3, B, H, N, Dh)
    q, k, v = qkv[0], qkv[1], qkv[2]
    scores = jnp.einsum("bhnd,bhmd->bhnm", q, k) / math.sqrt(head_dim)
    probs = jax.nn.softmax(scores, axis=-1)
    attn = jnp.einsum("bhnm,bhmd->bhnd", probs, v)               # (B, H, N, Dh)
    attn = jnp.transpose(attn, (0, 2, 1, 3)).reshape(B, N, C)
    return jnp.einsum("bnc,oc->bno", attn, w_out) + b_out


if __name__ == "__main__":
    # Small shapes consistent with the module: B=2, N=8 tokens, C=32, 4 heads.
    B, N, C, H = 2, 8, 32, 4

    key = jax.random.PRNGKey(0)
    kx, k1, k2, k3, k4 = jax.random.split(key, 5)

    x = jax.random.normal(kx, (B, N, C), dtype=jnp.float32)

    # Deterministic parameter init (synthetic, PyTorch nn.Linear shapes).
    w_qkv = jax.random.normal(k1, (3 * C, C), dtype=jnp.float32) * 0.05
    b_qkv = jax.random.normal(k2, (3 * C,), dtype=jnp.float32) * 0.05
    w_out = jax.random.normal(k3, (C, C), dtype=jnp.float32) * 0.05
    b_out = jax.random.normal(k4, (C,), dtype=jnp.float32) * 0.05

    out = mhsa_pallas(x, w_qkv, b_qkv, w_out, b_out, num_heads=H)
    out = jax.block_until_ready(out)

    ref = mhsa_reference(x, w_qkv, b_qkv, w_out, b_out, num_heads=H)
    assert out.shape == (B, N, C)
    # Tolerance accounts for the bf16 MXU inputs (f32 accumulation throughout).
    assert jnp.allclose(out, ref, atol=2e-2, rtol=2e-2), "mismatch vs reference"

    print("KERNEL_OK")
</pallas_src>

<mosaic_0001>
module attributes {stable_mosaic.version = 11 : i64} {
  func.func @_mhsa_kernel(%arg0: i32, %arg1: memref<1x8x32xbf16, #tpu.memory_space<vmem>>, %arg2: memref<32x96xbf16, #tpu.memory_space<vmem>>, %arg3: memref<1x96xf32, #tpu.memory_space<vmem>>, %arg4: memref<32x32xbf16, #tpu.memory_space<vmem>>, %arg5: memref<1x32xf32, #tpu.memory_space<vmem>>, %arg6: memref<1x8x32xf32, #tpu.memory_space<vmem>>, %arg7: memref<8x96xf32, #tpu.memory_space<vmem>>, %arg8: memref<8x32xf32, #tpu.memory_space<vmem>>) attributes {dimension_semantics = [#tpu.dimension_semantics<parallel>], iteration_bounds = array<i64: 2>, scalar_prefetch = 0 : i64, scratch_operands = 2 : i64, tpu.core_type = #tpu.core_type<tc>, window_params = [{transform_indices = @transform_0, window_bounds = array<i64: 1, 8, 32>}, {pipeline_mode = #tpu.pipeline_mode<synchronous>, transform_indices = @transform_1, window_bounds = array<i64: 32, 96>}, {pipeline_mode = #tpu.pipeline_mode<synchronous>, transform_indices = @transform_2, window_bounds = array<i64: 1, 96>}, {pipeline_mode = #tpu.pipeline_mode<synchronous>, transform_indices = @transform_3, window_bounds = array<i64: 32, 32>}, {pipeline_mode = #tpu.pipeline_mode<synchronous>, transform_indices = @transform_4, window_bounds = array<i64: 1, 32>}, {transform_indices = @transform_5, window_bounds = array<i64: 1, 8, 32>}]} {
    %c0 = arith.constant 0 : index
    %c0_0 = arith.constant 0 : index
    %c0_1 = arith.constant 0 : index
    %0 = vector.load %arg1[%c0, %c0_0, %c0_1] : memref<1x8x32xbf16, #tpu.memory_space<vmem>>, vector<1x8x32xbf16>
    %1 = vector.shape_cast %0 : vector<1x8x32xbf16> to vector<8x32xbf16>
    %c0_2 = arith.constant 0 : index
    %c0_3 = arith.constant 0 : index
    %2 = vector.load %arg2[%c0_2, %c0_3] : memref<32x96xbf16, #tpu.memory_space<vmem>>, vector<32x96xbf16>
    %cst = arith.constant dense<0.000000e+00> : vector<8x96xf32>
    %3 = tpu.matmul %1, %2, %cst {dimension_numbers = #tpu.dot_dimension_numbers<[1], [0], [0], [1], [0, 0, 1, 1], [], []>} : vector<8x32xbf16>, vector<32x96xbf16>, vector<8x96xf32> -> vector<8x96xf32>
    %c0_4 = arith.constant 0 : index
    %c0_5 = arith.constant 0 : index
    %4 = vector.load %arg3[%c0_4, %c0_5] : memref<1x96xf32, #tpu.memory_space<vmem>>, vector<1x96xf32>
    %5 = vector.broadcast %4 : vector<1x96xf32> to vector<8x96xf32>
    %6 = arith.addf %3, %5 : vector<8x96xf32>
    %c0_6 = arith.constant 0 : index
    %c0_7 = arith.constant 0 : index
    %7 = vector.load %arg7[%c0_6, %c0_7] : memref<8x96xf32, #tpu.memory_space<vmem>>, vector<8x96xf32>
    tpu.vector_store %arg7[%c0_6, %c0_7], %6 {strides = array<i32>} : memref<8x96xf32, #tpu.memory_space<vmem>>, vector<8x96xf32>,
    %cst_8 = arith.constant 0.000000e+00 : f32
    %8 = vector.broadcast %cst_8 : f32 to vector<8x32xf32>
    %c0_9 = arith.constant 0 : index
    %c0_10 = arith.constant 0 : index
    %9 = vector.load %arg8[%c0_9, %c0_10] : memref<8x32xf32, #tpu.memory_space<vmem>>, vector<8x32xf32>
    tpu.vector_store %arg8[%c0_9, %c0_10], %8 {strides = array<i32>} : memref<8x32xf32, #tpu.memory_space<vmem>>, vector<8x32xf32>,
    %c0_11 = arith.constant 0 : index
    %c0_12 = arith.constant 0 : index
    %10 = vector.load %arg7[%c0_11, %c0_12] : memref<8x96xf32, #tpu.memory_space<vmem>>, vector<8x8xf32>
    %cst_13 = arith.constant 0.353553385 : f32
    %11 = vector.broadcast %cst_13 : f32 to vector<8x8xf32>
    %12 = arith.mulf %10, %11 : vector<8x8xf32>
    %13 = arith.truncf %12 : vector<8x8xf32> to vector<8x8xbf16>
    %c0_14 = arith.constant 0 : index
    %c32 = arith.constant 32 : index
    %14 = vector.load %arg7[%c0_14, %c32] : memref<8x96xf32, #tpu.memory_space<vmem>>, vector<8x8xf32>
    %15 = arith.truncf %14 : vector<8x8xf32> to vector<8x8xbf16>
    %c0_15 = arith.constant 0 : index
    %c64 = arith.constant 64 : index
    %16 = vector.load %arg7[%c0_15, %c64] : memref<8x96xf32, #tpu.memory_space<vmem>>, vector<8x8xf32>
    %17 = arith.truncf %16 : vector<8x8xf32> to vector<8x8xbf16>
    %cst_16 = arith.constant dense<0.000000e+00> : vector<8x8xf32>
    %18 = tpu.matmul %13, %15, %cst_16 {dimension_numbers = #tpu.dot_dimension_numbers<[1], [1], [0], [0], [0, 0, 1, 0], [], []>} : vector<8x8xbf16>, vector<8x8xbf16>, vector<8x8xf32> -> vector<8x8xf32>
    %cst_17 = arith.constant dense<0xFF800000> : vector<8xf32>
    %19 = vector.multi_reduction <maximumf>, %18, %cst_17 [1] : vector<8x8xf32> to vector<8xf32>
    %20 = vector.shape_cast %19 : vector<8xf32> to vector<8x1xf32>
    %21 = vector.broadcast %20 : vector<8x1xf32> to vector<8x8xf32>
    %22 = arith.subf %18, %21 : vector<8x8xf32>
    %23 = math.exp %22 : vector<8x8xf32>
    %cst_18 = arith.constant dense<0.000000e+00> : vector<8xf32>
    %24 = vector.multi_reduction <add>, %23, %cst_18 [1] : vector<8x8xf32> to vector<8xf32>
    %25 = vector.shape_cast %24 : vector<8xf32> to vector<8x1xf32>
    %26 = tpu.reciprocal %25 {approx = true} : vector<8x1xf32> -> vector<8x1xf32>
    %27 = vector.broadcast %26 : vector<8x1xf32> to vector<8x8xf32>
    %28 = arith.mulf %23, %27 : vector<8x8xf32>
    %29 = arith.truncf %28 : vector<8x8xf32> to vector<8x8xbf16>
    %cst_19 = arith.constant dense<0.000000e+00> : vector<8x8xf32>
    %30 = tpu.matmul %29, %17, %cst_19 {dimension_numbers = #tpu.dot_dimension_numbers<[1], [0], [0], [1], [0, 0, 1, 1], [], []>} : vector<8x8xbf16>, vector<8x8xbf16>, vector<8x8xf32> -> vector<8x8xf32>
    %c0_20 = arith.constant 0 : index
    %c0_21 = arith.constant 0 : index
    %31 = vector.load %arg8[%c0_20, %c0_21] : memref<8x32xf32, #tpu.memory_space<vmem>>, vector<8x32xf32>
    %32 = arith.truncf %30 : vector<8x8xf32> to vector<8x8xbf16>
    %c0_22 = arith.constant 0 : index
    %c0_23 = arith.constant 0 : index
    %33 = vector.load %arg4[%c0_22, %c0_23] : memref<32x32xbf16, #tpu.memory_space<vmem>>, vector<8x32xbf16>
    %cst_24 = arith.constant dense<0.000000e+00> : vector<8x32xf32>
    %34 = tpu.matmul %32, %33, %cst_24 {dimension_numbers = #tpu.dot_dimension_numbers<[1], [0], [0], [1], [0, 0, 1, 1], [], []>} : vector<8x8xbf16>, vector<8x32xbf16>, vector<8x32xf32> -> vector<8x32xf32>
    %35 = arith.addf %31, %34 : vector<8x32xf32>
    %c0_25 = arith.constant 0 : index
    %c0_26 = arith.constant 0 : index
    %36 = vector.load %arg8[%c0_25, %c0_26] : memref<8x32xf32, #tpu.memory_space<vmem>>, vector<8x32xf32>
    tpu.vector_store %arg8[%c0_25, %c0_26], %35 {strides = array<i32>} : memref<8x32xf32, #tpu.memory_space<vmem>>, vector<8x32xf32>,
    %c0_27 = arith.constant 0 : index
    %c8 = arith.constant 8 : index
    %37 = vector.load %arg7[%c0_27, %c8] : memref<8x96xf32, #tpu.memory_space<vmem>>, vector<8x8xf32>
    %cst_28 = arith.constant 0.353553385 : f32
    %38 = vector.broadcast %cst_28 : f32 to vector<8x8xf32>
    %39 = arith.mulf %37, %38 : vector<8x8xf32>
    %40 = arith.truncf %39 : vector<8x8xf32> to vector<8x8xbf16>
    %c0_29 = arith.constant 0 : index
    %c40 = arith.constant 40 : index
    %41 = vector.load %arg7[%c0_29, %c40] : memref<8x96xf32, #tpu.memory_space<vmem>>, vector<8x8xf32>
    %42 = arith.truncf %41 : vector<8x8xf32> to vector<8x8xbf16>
    %c0_30 = arith.constant 0 : index
    %c72 = arith.constant 72 : index
    %43 = vector.load %arg7[%c0_30, %c72] : memref<8x96xf32, #tpu.memory_space<vmem>>, vector<8x8xf32>
    %44 = arith.truncf %43 : vector<8x8xf32> to vector<8x8xbf16>
    %cst_31 = arith.constant dense<0.000000e+00> : vector<8x8xf32>
    %45 = tpu.matmul %40, %42, %cst_31 {dimension_numbers = #tpu.dot_dimension_numbers<[1], [1], [0], [0], [0, 0, 1, 0], [], []>} : vector<8x8xbf16>, vector<8x8xbf16>, vector<8x8xf32> -> vector<8x8xf32>
    %cst_32 = arith.constant dense<0xFF800000> : vector<8xf32>
    %46 = vector.multi_reduction <maximumf>, %45, %cst_32 [1] : vector<8x8xf32> to vector<8xf32>
    %47 = vector.shape_cast %46 : vector<8xf32> to vector<8x1xf32>
    %48 = vector.broadcast %47 : vector<8x1xf32> to vector<8x8xf32>
    %49 = arith.subf %45, %48 : vector<8x8xf32>
    %50 = math.exp %49 : vector<8x8xf32>
    %cst_33 = arith.constant dense<0.000000e+00> : vector<8xf32>
    %51 = vector.multi_reduction <add>, %50, %cst_33 [1] : vector<8x8xf32> to vector<8xf32>
    %52 = vector.shape_cast %51 : vector<8xf32> to vector<8x1xf32>
    %53 = tpu.reciprocal %52 {approx = true} : vector<8x1xf32> -> vector<8x1xf32>
    %54 = vector.broadcast %53 : vector<8x1xf32> to vector<8x8xf32>
    %55 = arith.mulf %50, %54 : vector<8x8xf32>
    %56 = arith.truncf %55 : vector<8x8xf32> to vector<8x8xbf16>
    %cst_34 = arith.constant dense<0.000000e+00> : vector<8x8xf32>
    %57 = tpu.matmul %56, %44, %cst_34 {dimension_numbers = #tpu.dot_dimension_numbers<[1], [0], [0], [1], [0, 0, 1, 1], [], []>} : vector<8x8xbf16>, vector<8x8xbf16>, vector<8x8xf32> -> vector<8x8xf32>
    %c0_35 = arith.constant 0 : index
    %c0_36 = arith.constant 0 : index
    %58 = vector.load %arg8[%c0_35, %c0_36] : memref<8x32xf32, #tpu.memory_space<vmem>>, vector<8x32xf32>
    %59 = arith.truncf %57 : vector<8x8xf32> to vector<8x8xbf16>
    %c8_37 = arith.constant 8 : index
    %c0_38 = arith.constant 0 : index
    %60 = vector.load %arg4[%c8_37, %c0_38] : memref<32x32xbf16, #tpu.memory_space<vmem>>, vector<8x32xbf16>
    %cst_39 = arith.constant dense<0.000000e+00> : vector<8x32xf32>
    %61 = tpu.matmul %59, %60, %cst_39 {dimension_numbers = #tpu.dot_dimension_numbers<[1], [0], [0], [1], [0, 0, 1, 1], [], []>} : vector<8x8xbf16>, vector<8x32xbf16>, vector<8x32xf32> -> vector<8x32xf32>
    %62 = arith.addf %58, %61 : vector<8x32xf32>
    %c0_40 = arith.constant 0 : index
    %c0_41 = arith.constant 0 : index
    %63 = vector.load %arg8[%c0_40, %c0_41] : memref<8x32xf32, #tpu.memory_space<vmem>>, vector<8x32xf32>
    tpu.vector_store %arg8[%c0_40, %c0_41], %62 {strides = array<i32>} : memref<8x32xf32, #tpu.memory_space<vmem>>, vector<8x32xf32>,
    %c0_42 = arith.constant 0 : index
    %c16 = arith.constant 16 : index
    %64 = vector.load %arg7[%c0_42, %c16] : memref<8x96xf32, #tpu.memory_space<vmem>>, vector<8x8xf32>
    %cst_43 = arith.constant 0.353553385 : f32
    %65 = vector.broadcast %cst_43 : f32 to vector<8x8xf32>
    %66 = arith.mulf %64, %65 : vector<8x8xf32>
    %67 = arith.truncf %66 : vector<8x8xf32> to vector<8x8xbf16>
    %c0_44 = arith.constant 0 : index
    %c48 = arith.constant 48 : index
    %68 = vector.load %arg7[%c0_44, %c48] : memref<8x96xf32, #tpu.memory_space<vmem>>, vector<8x8xf32>
    %69 = arith.truncf %68 : vector<8x8xf32> to vector<8x8xbf16>
    %c0_45 = arith.constant 0 : index
    %c80 = arith.constant 80 : index
    %70 = vector.load %arg7[%c0_45, %c80] : memref<8x96xf32, #tpu.memory_space<vmem>>, vector<8x8xf32>
    %71 = arith.truncf %70 : vector<8x8xf32> to vector<8x8xbf16>
    %cst_46 = arith.constant dense<0.000000e+00> : vector<8x8xf32>
    %72 = tpu.matmul %67, %69, %cst_46 {dimension_numbers = #tpu.dot_dimension_numbers<[1], [1], [0], [0], [0, 0, 1, 0], [], []>} : vector<8x8xbf16>, vector<8x8xbf16>, vector<8x8xf32> -> vector<8x8xf32>
    %cst_47 = arith.constant dense<0xFF800000> : vector<8xf32>
    %73 = vector.multi_reduction <maximumf>, %72, %cst_47 [1] : vector<8x8xf32> to vector<8xf32>
    %74 = vector.shape_cast %73 : vector<8xf32> to vector<8x1xf32>
    %75 = vector.broadcast %74 : vector<8x1xf32> to vector<8x8xf32>
    %76 = arith.subf %72, %75 : vector<8x8xf32>
    %77 = math.exp %76 : vector<8x8xf32>
    %cst_48 = arith.constant dense<0.000000e+00> : vector<8xf32>
    %78 = vector.multi_reduction <add>, %77, %cst_48 [1] : vector<8x8xf32> to vector<8xf32>
    %79 = vector.shape_cast %78 : vector<8xf32> to vector<8x1xf32>
    %80 = tpu.reciprocal %79 {approx = true} : vector<8x1xf32> -> vector<8x1xf32>
    %81 = vector.broadcast %80 : vector<8x1xf32> to vector<8x8xf32>
    %82 = arith.mulf %77, %81 : vector<8x8xf32>
    %83 = arith.truncf %82 : vector<8x8xf32> to vector<8x8xbf16>
    %cst_49 = arith.constant dense<0.000000e+00> : vector<8x8xf32>
    %84 = tpu.matmul %83, %71, %cst_49 {dimension_numbers = #tpu.dot_dimension_numbers<[1], [0], [0], [1], [0, 0, 1, 1], [], []>} : vector<8x8xbf16>, vector<8x8xbf16>, vector<8x8xf32> -> vector<8x8xf32>
    %c0_50 = arith.constant 0 : index
    %c0_51 = arith.constant 0 : index
    %85 = vector.load %arg8[%c0_50, %c0_51] : memref<8x32xf32, #tpu.memory_space<vmem>>, vector<8x32xf32>
    %86 = arith.truncf %84 : vector<8x8xf32> to vector<8x8xbf16>
    %c16_52 = arith.constant 16 : index
    %c0_53 = arith.constant 0 : index
    %87 = vector.load %arg4[%c16_52, %c0_53] : memref<32x32xbf16, #tpu.memory_space<vmem>>, vector<8x32xbf16>
    %cst_54 = arith.constant dense<0.000000e+00> : vector<8x32xf32>
    %88 = tpu.matmul %86, %87, %cst_54 {dimension_numbers = #tpu.dot_dimension_numbers<[1], [0], [0], [1], [0, 0, 1, 1], [], []>} : vector<8x8xbf16>, vector<8x32xbf16>, vector<8x32xf32> -> vector<8x32xf32>
    %89 = arith.addf %85, %88 : vector<8x32xf32>
    %c0_55 = arith.constant 0 : index
    %c0_56 = arith.constant 0 : index
    %90 = vector.load %arg8[%c0_55, %c0_56] : memref<8x32xf32, #tpu.memory_space<vmem>>, vector<8x32xf32>
    tpu.vector_store %arg8[%c0_55, %c0_56], %89 {strides = array<i32>} : memref<8x32xf32, #tpu.memory_space<vmem>>, vector<8x32xf32>,
    %c0_57 = arith.constant 0 : index
    %c24 = arith.constant 24 : index
    %91 = vector.load %arg7[%c0_57, %c24] : memref<8x96xf32, #tpu.memory_space<vmem>>, vector<8x8xf32>
    %cst_58 = arith.constant 0.353553385 : f32
    %92 = vector.broadcast %cst_58 : f32 to vector<8x8xf32>
    %93 = arith.mulf %91, %92 : vector<8x8xf32>
    %94 = arith.truncf %93 : vector<8x8xf32> to vector<8x8xbf16>
    %c0_59 = arith.constant 0 : index
    %c56 = arith.constant 56 : index
    %95 = vector.load %arg7[%c0_59, %c56] : memref<8x96xf32, #tpu.memory_space<vmem>>, vector<8x8xf32>
    %96 = arith.truncf %95 : vector<8x8xf32> to vector<8x8xbf16>
    %c0_60 = arith.constant 0 : index
    %c88 = arith.constant 88 : index
    %97 = vector.load %arg7[%c0_60, %c88] : memref<8x96xf32, #tpu.memory_space<vmem>>, vector<8x8xf32>
    %98 = arith.truncf %97 : vector<8x8xf32> to vector<8x8xbf16>
    %cst_61 = arith.constant dense<0.000000e+00> : vector<8x8xf32>
    %99 = tpu.matmul %94, %96, %cst_61 {dimension_numbers = #tpu.dot_dimension_numbers<[1], [1], [0], [0], [0, 0, 1, 0], [], []>} : vector<8x8xbf16>, vector<8x8xbf16>, vector<8x8xf32> -> vector<8x8xf32>
    %cst_62 = arith.constant dense<0xFF800000> : vector<8xf32>
    %100 = vector.multi_reduction <maximumf>, %99, %cst_62 [1] : vector<8x8xf32> to vector<8xf32>
    %101 = vector.shape_cast %100 : vector<8xf32> to vector<8x1xf32>
    %102 = vector.broadcast %101 : vector<8x1xf32> to vector<8x8xf32>
    %103 = arith.subf %99, %102 : vector<8x8xf32>
    %104 = math.exp %103 : vector<8x8xf32>
    %cst_63 = arith.constant dense<0.000000e+00> : vector<8xf32>
    %105 = vector.multi_reduction <add>, %104, %cst_63 [1] : vector<8x8xf32> to vector<8xf32>
    %106 = vector.shape_cast %105 : vector<8xf32> to vector<8x1xf32>
    %107 = tpu.reciprocal %106 {approx = true} : vector<8x1xf32> -> vector<8x1xf32>
    %108 = vector.broadcast %107 : vector<8x1xf32> to vector<8x8xf32>
    %109 = arith.mulf %104, %108 : vector<8x8xf32>
    %110 = arith.truncf %109 : vector<8x8xf32> to vector<8x8xbf16>
    %cst_64 = arith.constant dense<0.000000e+00> : vector<8x8xf32>
    %111 = tpu.matmul %110, %98, %cst_64 {dimension_numbers = #tpu.dot_dimension_numbers<[1], [0], [0], [1], [0, 0, 1, 1], [], []>} : vector<8x8xbf16>, vector<8x8xbf16>, vector<8x8xf32> -> vector<8x8xf32>
    %c0_65 = arith.constant 0 : index
    %c0_66 = arith.constant 0 : index
    %112 = vector.load %arg8[%c0_65, %c0_66] : memref<8x32xf32, #tpu.memory_space<vmem>>, vector<8x32xf32>
    %113 = arith.truncf %111 : vector<8x8xf32> to vector<8x8xbf16>
    %c24_67 = arith.constant 24 : index
    %c0_68 = arith.constant 0 : index
    %114 = vector.load %arg4[%c24_67, %c0_68] : memref<32x32xbf16, #tpu.memory_space<vmem>>, vector<8x32xbf16>
    %cst_69 = arith.constant dense<0.000000e+00> : vector<8x32xf32>
    %115 = tpu.matmul %113, %114, %cst_69 {dimension_numbers = #tpu.dot_dimension_numbers<[1], [0], [0], [1], [0, 0, 1, 1], [], []>} : vector<8x8xbf16>, vector<8x32xbf16>, vector<8x32xf32> -> vector<8x32xf32>
    %116 = arith.addf %112, %115 : vector<8x32xf32>
    %c0_70 = arith.constant 0 : index
    %c0_71 = arith.constant 0 : index
    %117 = vector.load %arg8[%c0_70, %c0_71] : memref<8x32xf32, #tpu.memory_space<vmem>>, vector<8x32xf32>
    tpu.vector_store %arg8[%c0_70, %c0_71], %116 {strides = array<i32>} : memref<8x32xf32, #tpu.memory_space<vmem>>, vector<8x32xf32>,
    %c0_72 = arith.constant 0 : index
    %c0_73 = arith.constant 0 : index
    %118 = vector.load %arg8[%c0_72, %c0_73] : memref<8x32xf32, #tpu.memory_space<vmem>>, vector<8x32xf32>
    %c0_74 = arith.constant 0 : index
    %c0_75 = arith.constant 0 : index
    %119 = vector.load %arg5[%c0_74, %c0_75] : memref<1x32xf32, #tpu.memory_space<vmem>>, vector<1x32xf32>
    %120 = vector.broadcast %119 : vector<1x32xf32> to vector<8x32xf32>
    %121 = arith.addf %118, %120 : vector<8x32xf32>
    %c0_76 = arith.constant 0 : index
    %c0_77 = arith.constant 0 : index
    %c0_78 = arith.constant 0 : index
    %122 = vector.load %arg6[%c0_76, %c0_77, %c0_78] : memref<1x8x32xf32, #tpu.memory_space<vmem>>, vector<1x8x32xf32>
    %123 = vector.shape_cast %122 : vector<1x8x32xf32> to vector<8x32xf32>
    %124 = vector.shape_cast %121 : vector<8x32xf32> to vector<1x8x32xf32>
    tpu.vector_store %arg6[%c0_76, %c0_77, %c0_78], %124 {strides = array<i32>} : memref<1x8x32xf32, #tpu.memory_space<vmem>>, vector<1x8x32xf32>,
    return
  }
  func.func @transform_0(%arg0: i32) -> (i32, i32, i32) {
    %c0_i32 = arith.constant 0 : i32
    %c0_i32_0 = arith.constant 0 : i32
    %c0_i32_1 = arith.constant 0 : i32
    return %arg0, %c0_i32, %c0_i32_0 : i32, i32, i32
  }
  func.func @transform_1(%arg0: i32) -> (i32, i32) {
    %c0_i32 = arith.constant 0 : i32
    %c0_i32_0 = arith.constant 0 : i32
    %c0_i32_1 = arith.constant 0 : i32
    return %c0_i32, %c0_i32_0 : i32, i32
  }
  func.func @transform_2(%arg0: i32) -> (i32, i32) {
    %c0_i32 = arith.constant 0 : i32
    %c0_i32_0 = arith.constant 0 : i32
    %c0_i32_1 = arith.constant 0 : i32
    return %c0_i32, %c0_i32_0 : i32, i32
  }
  func.func @transform_3(%arg0: i32) -> (i32, i32) {
    %c0_i32 = arith.constant 0 : i32
    %c0_i32_0 = arith.constant 0 : i32
    %c0_i32_1 = arith.constant 0 : i32
    return %c0_i32, %c0_i32_0 : i32, i32
  }
  func.func @transform_4(%arg0: i32) -> (i32, i32) {
    %c0_i32 = arith.constant 0 : i32
    %c0_i32_0 = arith.constant 0 : i32
    %c0_i32_1 = arith.constant 0 : i32
    return %c0_i32, %c0_i32_0 : i32, i32
  }
  func.func @transform_5(%arg0: i32) -> (i32, i32, i32) {
    %c0_i32 = arith.constant 0 : i32
    %c0_i32_0 = arith.constant 0 : i32
    %c0_i32_1 = arith.constant 0 : i32
    return %arg0, %c0_i32, %c0_i32_0 : i32, i32, i32
  }
}

</mosaic_0001>

<llo_original>
// kernel: tpu_custom_call.1
$region0: #{tpu_custom_call.1}
  #allocation0 [shape = 'u32[]', space=smem, size = 0x4, offset = 0x4, fixed_abs, tag = 'smem constant byte address 0x4 - core index']
  #allocation1 [shape = 'u32[144,128]{1,0:T(1,128)}', space=vmem, size = 0x12000, scoped, tag = 'internal scratch']
  #allocation2 [shape = 'f32[8,96]{1,0:T(8,128)}', space=vmem, size = 0x1000, scoped, tag = 'scratch operand']
  #allocation3 [shape = 'f32[8,32]{1,0:T(8,128)}', space=vmem, size = 0x1000, scoped, tag = 'scratch operand']
  %s0 = inlined_call_operand.hbm [shape: bf16[2,8,32], index: 0, kind: input, shape index: {}]
  %s1 = inlined_call_operand.hbm [shape: bf16[32,96], index: 1, kind: input, shape index: {}]
  %s2 = inlined_call_operand.vmem [shape: f32[1,96], index: 2, kind: input, shape index: {}]
  %s3 = inlined_call_operand.hbm [shape: bf16[32,32], index: 3, kind: input, shape index: {}]
  %s4 = inlined_call_operand.vmem [shape: f32[1,32], index: 4, kind: input, shape index: {}]
  %s5 = inlined_call_operand.hbm [shape: f32[2,8,32], index: 5, kind: output, shape index: {}]
  %s6 = sld [smem:[#allocation0]]
  $region65: #{tpu_custom_call.1} parent=0
    _
  %s8 = ssub.s32 1, %s6
  %s9 = scalar_select 0, %s8, %s6
  $region1: #{tpu_custom_call.1} parent=0
    #allocation4 [shape = 'u8[4096]{0}', space=vmem, size = 0x1000, scoped, tag = 'input window, operand 0']
    #allocation5 [shape = 's32[2]{0}', space=sflag, size = 0x8, scoped, tag = 'scoped memory for tpu_custom_call.1']
    #allocation6 [shape = 's32[2]{0}', space=sflag, size = 0x8, scoped, tag = 'scoped memory for tpu_custom_call.1']
    #allocation7 [shape = 'u8[8192]{0}', space=vmem, size = 0x2000, scoped, tag = 'input window, operand 1, single buffered']
    #allocation8 [shape = 's32[1]{0}', space=sflag, size = 0x4, scoped, tag = 'scoped memory for tpu_custom_call.1']
    #allocation9 [shape = 'u8[8192]{0}', space=vmem, size = 0x2000, scoped, tag = 'input window, operand 3, single buffered']
    #allocation10 [shape = 'u8[8192]{0}', space=vmem, size = 0x2000, scoped, tag = 'output window, operand 0']
    %10 = vsyncpa [#allocation5], 0
    %s11 = scalar_lea.sflag [#allocation5], 1
    %12 = vsyncpa %s11, 0
    %13 = vsyncpa [#allocation8], 0
    %14 = vsyncpa [#allocation6], 0
    %s15 = scalar_lea.sflag [#allocation6], 1
    %16 = vsyncpa %s15, 0
    loop: start=0, step=1, limit=4
    $region2: #{tpu_custom_call.1} parent=1 // loop_pre_header
      _
    $region3: #{tpu_custom_call.1} parent=1 // loop_header
      %s18 = sphi 0, %s22
      %p19 = scmp.ge.s32.totalorder %s18, 4
      %s28 = sphi 0, %s30
      %s31 = sphi 0, %s28
      %s32 = sphi 0, %s31
      %s48 = sphi 0, %s32
      %s52 = sphi 0, %s52
      %s54 = sphi 0, %s52
      %s55 = sphi 0, %s54
      %s69 = sphi 0, %s55
      %s73 = sphi 0, %s73
      %s75 = sphi 0, %s73
      %s76 = sphi 0, %s75
      %s90 = sphi 0, %s76
      %s94 = sphi 0, %s94
      %s96 = sphi 0, %s94
      %s97 = sphi 0, %s96
      %s111 = sphi 0, %s97
      %s115 = sphi 0, %s115
      %s117 = sphi 0, %s115
      %s118 = sphi 0, %s117
      %s132 = sphi 0, %s118
      %s138 = sphi 0, %s140
      %s141 = sphi 0, %s138
      %s142 = sphi 0, %s141
      %s158 = sphi 0, %s142
    $region4: #{tpu_custom_call.1} parent=1 // loop_header_branch
      %21 = sbr.rel (%p19) target = $region8
    $region5: #{tpu_custom_call.1} parent=1 // loop_body
      %s23 = ssub.s32 %s18, 1
      %s24 = ssub.s32 %s18, 2
      %s25 = sadd.s32 %s18, 1
      %s26 = ssub.s32 %s18, %s25
      %p27 = scmp.eq.s32.totalorder %s26, 0
      %s29 = sadd.s32 %s28, 1
      %s30 = scalar_select %p27, %s28, %s29
      %p33 = pneg %p27
      %p34 = scmp.eq.s32.totalorder %s18, 1
      %p35 = por %p33, %p34
      %p36 = scmp.ne.s32.totalorder %s28, %s31
      %p37 = scmp.eq.s32.totalorder %s18, 0
      %p38 = por %p36, %p37
      %p39 = scmp.ne.s32.totalorder %s28, %s31
      %p40 = scmp.eq.s32.totalorder %s23, 1
      %p41 = por %p39, %p40
      %p42 = scmp.ne.s32.totalorder %s31, %s32
      %p43 = scmp.eq.s32.totalorder %s23, 0
      %p44 = por %p42, %p43
      %p45 = scmp.ne.s32.totalorder %s31, %s32
      %p46 = scmp.eq.s32.totalorder %s24, 1
      %p47 = por %p45, %p46
      %p49 = scmp.ne.s32.totalorder %s32, %s48
      %p50 = scmp.eq.s32.totalorder %s24, 0
      %p51 = por %p49, %p50
      %s53 = sadd.s32 %s52, 1
      %p56 = scmp.eq.s32.totalorder %s18, 1
      %p57 = scmp.ne.s32.totalorder %s52, %s54
      %p58 = scmp.eq.s32.totalorder %s18, 0
      %p59 = por %p57, %p58
      %p60 = scmp.ne.s32.totalorder %s52, %s54
      %p61 = scmp.eq.s32.totalorder %s23, 1
      %p62 = por %p60, %p61
      %p63 = scmp.ne.s32.totalorder %s54, %s55
      %p64 = scmp.eq.s32.totalorder %s23, 0
      %p65 = por %p63, %p64
      %p66 = scmp.ne.s32.totalorder %s54, %s55
      %p67 = scmp.eq.s32.totalorder %s24, 1
      %p68 = por %p66, %p67
      %p70 = scmp.ne.s32.totalorder %s55, %s69
      %p71 = scmp.eq.s32.totalorder %s24, 0
      %p72 = por %p70, %p71
      %s74 = sadd.s32 %s73, 1
      %p77 = scmp.eq.s32.totalorder %s18, 1
      %p78 = scmp.ne.s32.totalorder %s73, %s75
      %p79 = scmp.eq.s32.totalorder %s18, 0
      %p80 = por %p78, %p79
      %p81 = scmp.ne.s32.totalorder %s73, %s75
      %p82 = scmp.eq.s32.totalorder %s23, 1
      %p83 = por %p81, %p82
      %p84 = scmp.ne.s32.totalorder %s75, %s76
      %p85 = scmp.eq.s32.totalorder %s23, 0
      %p86 = por %p84, %p85
      %p87 = scmp.ne.s32.totalorder %s75, %s76
      %p88 = scmp.eq.s32.totalorder %s24, 1
      %p89 = por %p87, %p88
      %p91 = scmp.ne.s32.totalorder %s76, %s90
      %p92 = scmp.eq.s32.totalorder %s24, 0
      %p93 = por %p91, %p92
      %s95 = sadd.s32 %s94, 1
      %p98 = scmp.eq.s32.totalorder %s18, 1
      %p99 = scmp.ne.s32.totalorder %s94, %s96
      %p100 = scmp.eq.s32.totalorder %s18, 0
      %p101 = por %p99, %p100
      %p102 = scmp.ne.s32.totalorder %s94, %s96
      %p103 = scmp.eq.s32.totalorder %s23, 1
      %p104 = por %p102, %p103
      %p105 = scmp.ne.s32.totalorder %s96, %s97
      %p106 = scmp.eq.s32.totalorder %s23, 0
      %p107 = por %p105, %p106
      %p108 = scmp.ne.s32.totalorder %s96, %s97
      %p109 = scmp.eq.s32.totalorder %s24, 1
      %p110 = por %p108, %p109
      %p112 = scmp.ne.s32.totalorder %s97, %s111
      %p113 = scmp.eq.s32.totalorder %s24, 0
      %p114 = por %p112, %p113
      %s116 = sadd.s32 %s115, 1
      %p119 = scmp.eq.s32.totalorder %s18, 1
      %p120 = scmp.ne.s32.totalorder %s115, %s117
      %p121 = scmp.eq.s32.totalorder %s18, 0
      %p122 = por %p120, %p121
      %p123 = scmp.ne.s32.totalorder %s115, %s117
      %p124 = scmp.eq.s32.totalorder %s23, 1
      %p125 = por %p123, %p124
      %p126 = scmp.ne.s32.totalorder %s117, %s118
      %p127 = scmp.eq.s32.totalorder %s23, 0
      %p128 = por %p126, %p127
      %p129 = scmp.ne.s32.totalorder %s117, %s118
      %p130 = scmp.eq.s32.totalorder %s24, 1
      %p131 = por %p129, %p130
      %p133 = scmp.ne.s32.totalorder %s118, %s132
      %p134 = scmp.eq.s32.totalorder %s24, 0
      %p135 = por %p133, %p134
      %s136 = ssub.s32 %s18, %s25
      %p137 = scmp.eq.s32.totalorder %s136, 0
      %s139 = sadd.s32 %s138, 1
      %s140 = scalar_select %p137, %s138, %s139
      %p143 = pneg %p137
      %p144 = scmp.eq.s32.totalorder %s18, 1
      %p145 = por %p143, %p144
      %p146 = scmp.ne.s32.totalorder %s138, %s141
      %p147 = scmp.eq.s32.totalorder %s18, 0
      %p148 = por %p146, %p147
      %p149 = scmp.ne.s32.totalorder %s138, %s141
      %p150 = scmp.eq.s32.totalorder %s23, 1
      %p151 = por %p149, %p150
      %p152 = scmp.ne.s32.totalorder %s141, %s142
      %p153 = scmp.eq.s32.totalorder %s23, 0
      %p154 = por %p152, %p153
      %p155 = scmp.ne.s32.totalorder %s141, %s142
      %p156 = scmp.eq.s32.totalorder %s24, 1
      %p157 = por %p155, %p156
      %p159 = scmp.ne.s32.totalorder %s142, %s158
      %p160 = scmp.eq.s32.totalorder %s24, 0
      %p161 = por %p159, %p160
      %p162 = scmp.le.s32.totalorder 1, %s18
      %p163 = scmp.lt.s32.totalorder %s18, 3
      %p164 = pnand %p162, %p163
      %p165 = pneg %p164
      // Predicated region
      $region9: #{tpu_custom_call.1} parent=5 // pred_check
        _
      $region10: #{tpu_custom_call.1} parent=5 // pred_check_branch
        %167 = sbr.rel (%p164) target = $region12
      $region11: #{tpu_custom_call.1} parent=5 // pred_region
        %s168 = ssub.s32 %s18, 1
        // Predicated region
        $region13: #{tpu_custom_call.1} parent=11 // pred_check
          %p169 = pneg %p65
        $region14: #{tpu_custom_call.1} parent=11 // pred_check_branch
          %171 = sbr.rel (%p169) target = $region16
        $region15: #{tpu_custom_call.1} parent=11 // pred_region
          %s173 = ssub.s32 256, 256
          %174 = vsyncadd [#allocation8], %s173
          %s175 = sshll.u32 [#allocation7], 4
          %s176 = int_to_ptr.vmem [resolvable:$true] %s175
          %181 = dma.hbm_to_vmem [thread:$0]  %s1, 256, %s176, [#allocation8], 64, 64, 4
        $region16: #{tpu_custom_call.1} parent=11 // pred_fallthru
          _
        // Predicated region
        $region17: #{tpu_custom_call.1} parent=11 // pred_check
          %p182 = pneg %p86
        $region18: #{tpu_custom_call.1} parent=11 // pred_check_branch
          %184 = sbr.rel (%p182) target = $region20
        $region19: #{tpu_custom_call.1} parent=11 // pred_region
          _
        $region20: #{tpu_custom_call.1} parent=11 // pred_fallthru
          _
        // Predicated region
        $region21: #{tpu_custom_call.1} parent=11 // pred_check
          %p185 = pneg %p107
        $region22: #{tpu_custom_call.1} parent=11 // pred_check_branch
          %187 = sbr.rel (%p185) target = $region24
        $region23: #{tpu_custom_call.1} parent=11 // pred_region
          %s189 = ssub.s32 256, 256
          %190 = vsyncadd [#allocation8], %s189
          %s191 = sshll.u32 [#allocation9], 4
          %s192 = int_to_ptr.vmem [resolvable:$true] %s191
          %197 = dma.hbm_to_vmem [thread:$0]  %s3, 256, %s192, [#allocation8], 64, 64, 4
        $region24: #{tpu_custom_call.1} parent=11 // pred_fallthru
          _
        // Predicated region
        $region25: #{tpu_custom_call.1} parent=11 // pred_check
          %p198 = pneg %p128
        $region26: #{tpu_custom_call.1} parent=11 // pred_check_branch
          %200 = sbr.rel (%p198) target = $region28
        $region27: #{tpu_custom_call.1} parent=11 // pred_region
          _
        $region28: #{tpu_custom_call.1} parent=11 // pred_fallthru
          _
      $region12: #{tpu_custom_call.1} parent=5 // pred_fallthru
        _
      %p201 = scmp.lt.s32.totalorder %s18, 2
      // Predicated region
      $region29: #{tpu_custom_call.1} parent=5 // pred_check
        %p202 = pneg %p201
      $region30: #{tpu_custom_call.1} parent=5 // pred_check_branch
        %204 = sbr.rel (%p202) target = $region32
      $region31: #{tpu_custom_call.1} parent=5 // pred_region
        // Predicated region
        $region33: #{tpu_custom_call.1} parent=31 // pred_check
          %p205 = pneg %p38
        $region34: #{tpu_custom_call.1} parent=31 // pred_check_branch
          %207 = sbr.rel (%p205) target = $region36
        $region35: #{tpu_custom_call.1} parent=31 // pred_region
          %s208 = sand.u32 %s28, 1
          %s209 = scalar_lea.sflag [#allocation5], %s208
          %s210 = sand.u32 %s28, 1
          %s211 = smul.addr %s210, 4
          %s212 = scalar_lea.vmem [#allocation4], %s211
          %s214 = ssub.s32 64, 64
          %215 = vsyncadd %s209, %s214
          %s216 = smul.addr %s18, 64
          %s217 = scalar_lea.hbm %s0, %s216
          %s219 = sshll.u32 %s212, 4
          %s220 = int_to_ptr.vmem [resolvable:$true] %s219
          %222 = dma.hbm_to_vmem [thread:$0]  %s217, 64, %s220, %s209
        $region36: #{tpu_custom_call.1} parent=31 // pred_fallthru
          _
      $region32: #{tpu_custom_call.1} parent=5 // pred_fallthru
        _
      %p223 = scmp.le.s32.totalorder 1, %s18
      %p224 = scmp.lt.s32.totalorder %s18, 3
      %p225 = pnand %p223, %p224
      %p226 = pneg %p225
      // Predicated region
      $region37: #{tpu_custom_call.1} parent=5 // pred_check
        _
      $region38: #{tpu_custom_call.1} parent=5 // pred_check_branch
        %228 = sbr.rel (%p225) target = $region40
      $region39: #{tpu_custom_call.1} parent=5 // pred_region
        %s229 = ssub.s32 %s18, 1
        %s230 = sand.u32 %s31, 1
        %s231 = scalar_lea.sflag [#allocation5], %s230
        %s232 = sand.u32 %s31, 1
        %s233 = smul.addr %s232, 4
        %s234 = scalar_lea.vmem [#allocation4], %s233
        // Predicated region
        $region41: #{tpu_custom_call.1} parent=39 // pred_check
          %p235 = pneg %p44
        $region42: #{tpu_custom_call.1} parent=39 // pred_check_branch
          %237 = sbr.rel (%p235) target = $region44
        $region43: #{tpu_custom_call.1} parent=39 // pred_region
          %238 = dma.done %s231, 64
        $region44: #{tpu_custom_call.1} parent=39 // pred_fallthru
          _
        // Predicated region
        $region45: #{tpu_custom_call.1} parent=39 // pred_check
          %p239 = pneg %p65
        $region46: #{tpu_custom_call.1} parent=39 // pred_check_branch
          %241 = sbr.rel (%p239) target = $region48
        $region47: #{tpu_custom_call.1} parent=39 // pred_region
          %242 = dma.done [#allocation8], 256
        $region48: #{tpu_custom_call.1} parent=39 // pred_fallthru
          _
        // Predicated region
        $region49: #{tpu_custom_call.1} parent=39 // pred_check
          %p243 = pneg %p107
        $region50: #{tpu_custom_call.1} parent=39 // pred_check_branch
          %245 = sbr.rel (%p243) target = $region52
        $region51: #{tpu_custom_call.1} parent=39 // pred_region
          %246 = dma.done [#allocation8], 256
        $region52: #{tpu_custom_call.1} parent=39 // pred_fallthru
          _
        %s247 = sand.u32 %s31, 1
        %s248 = scalar_lea.sflag [#allocation5], %s247
        %s249 = sand.u32 %s31, 1
        %s250 = smul.addr %s249, 4
        %s251 = scalar_lea.vmem [#allocation4], %s250
        %p252 = pneg %p44
        %p253 = pneg %p41
        %p254 = pneg %p65
        %p255 = pneg %p62
        %p256 = pneg %p86
        %p257 = pneg %p83
        %p258 = pneg %p107
        %p259 = pneg %p104
        %p260 = pneg %p128
        %p261 = pneg %p125
        %p262 = pneg %p154
        %p263 = pneg %p151
        %s264 = sand.u32 %s141, 1
        %s265 = scalar_lea.sflag [#allocation6], %s264
        %s266 = sand.u32 %s141, 1
        %s267 = smul.addr %s266, 8
        %s268 = scalar_lea.vmem [#allocation10], %s267
        %v270 = vld [vmem:[%s234] sm:$0xf]
        %v271 = vld [vmem:[#allocation7] sm:$0xf]
        %v272 = vld [vmem:[#allocation7 + $0x4] sm:$0xf]
        %v273 = vld [vmem:[#allocation7 + $0x8] sm:$0xf]
        %v274 = vld [vmem:[#allocation7 + $0xc] sm:$0xf]
        %v275 = vld [vmem:[%s2] sm:$0x1]
        %v277 = vlaneseq
        %v278 = vshrl.u32 %v277, 7
        %v279 = vsub.s32 0, %v278
        %v280 = vrot.slane %v275, %v279
        %v286 = vunpack.c.l.b16 %v271
        %v287 = vunpack.c.l.b16 %v272
        %v288 = vunpack.c.l.b16 %v273
        %v289 = vunpack.c.l.b16 %v274
        %v290 = vpack.c.b16 %v287, %v286
        %v291 = vpack.c.b16 %v289, %v288
        %vm294 = vcmask 261120
        %v296 = vsel %vm294, %v270, 0
        %298 = vmatprep.subr.bf16.mxu0 0
        %299 = vmatpush1.bf16.msra.mxu0 0
        %300 = vmatprep.subr.bf16.mxu0 0
        %301 = vmatpush1.bf16.msra.mxu0 0
        %302 = vmatprep.subr.bf16.mxu0 0
        %303 = vmatpush1.bf16.msra.mxu0 0
        %304 = vmatprep.subr.bf16.mxu0 0
        %305 = vmatpush1.bf16.msra.mxu0 0
        %306 = vmatprep.subr.bf16.mxu0 0
        %307 = vmatpush1.bf16.msra.mxu0 0
        %308 = vmatprep.subr.bf16.mxu0 0
        %309 = vmatpush1.bf16.msra.mxu0 0
        %310 = vmatprep.subr.bf16.mxu0 0
        %311 = vmatpush1.bf16.msra.mxu0 %v291
        %312 = vmatprep.subr.bf16.mxu0 0
        %313 = vmatpush1.bf16.msra.mxu0 %v290
        %314 = vmatprep.subr.bf16.mxu0 0
        %315 = vmatpush2.bf16.msra.mxu0 0
        %316 = vmatprep.subr.bf16.mxu0 0
        %317 = vmatpush2.bf16.msra.mxu0 0
        %318 = vmatprep.subr.bf16.mxu0 0
        %319 = vmatpush2.bf16.msra.mxu0 0
        %320 = vmatprep.subr.bf16.mxu0 0
        %321 = vmatpush2.bf16.msra.mxu0 0
        %322 = vmatprep.subr.bf16.mxu0 0
        %323 = vmatpush2.bf16.msra.mxu0 0
        %324 = vmatprep.subr.bf16.mxu0 0
        %325 = vmatpush2.bf16.msra.mxu0 0
        %326 = vmatprep.subr.bf16.mxu0 0
        %327 = vmatpush2.bf16.msra.mxu0 0
        %328 = vmatprep.subr.bf16.mxu0 0
        %329 = vmatpush2.bf16.msra.mxu0 0
        %330 = vmatprep.mubr.bf16.mxu0 0
        %331 = vmatmul.mubr.bf16.gmra.mxu0 %v296
        %v332 = vpop.f32.mrf.mxu0
        %v333 = vadd.f32 %v280, %v332
        %v334 = vpop.f32.mrf.mxu0
        %v335 = vpop.f32.mrf.mxu0
        %v336 = vpop.f32.mrf.mxu0
        %337 = vdwg.mxu0
        %vm338 = vcmask 785408
        %339 = vst.msk [vmem:[#allocation2] sm:$0xff] %vm338, %v333
        %340 = vst.msk [vmem:[#allocation3] sm:$0xff] %vm294, 0.0
        %v341 = vld [vmem:[#allocation2] sm:$0xff]
        %v342 = vmul.f32 %v341, 0.35355338
        %v343 = vpack.c.bf16 %v342, %v342
        %v344 = vpack.c.bf16 %v341, %v341
        %346 = vrot.lane.b32.xlu0 %v344, 96
        %v347 = vpop.permute.xlu0 %346
        %vm348 = vcmask 64512
        %v350 = vsel %vm348, %v343, 0
        %v353 = vsel %vm348, %v347, 0
        %355 = vmatprep.subr.bf16.mxu0 0
        %356 = vmatpush1.bf16.xpose.msra.mxu0 0
        %357 = vmatprep.subr.bf16.mxu0 0
        %358 = vmatpush1.bf16.xpose.msra.mxu0 0
        %359 = vmatprep.subr.bf16.mxu0 0
        %360 = vmatpush1.bf16.xpose.msra.mxu0 0
        %361 = vmatprep.subr.bf16.mxu0 0
        %362 = vmatpush1.bf16.xpose.msra.mxu0 0
        %363 = vmatprep.subr.bf16.mxu0 0
        %364 = vmatpush1.bf16.xpose.msra.mxu0 0
        %365 = vmatprep.subr.bf16.mxu0 0
        %366 = vmatpush1.bf16.xpose.msra.mxu0 0
        %367 = vmatprep.subr.bf16.mxu0 0
        %368 = vmatpush1.bf16.xpose.msra.mxu0 0
        %369 = vmatprep.subr.bf16.mxu0 0
        %370 = vmatpush1.bf16.xpose.msra.mxu0 %v353
        %371 = vmatprep.subr.bf16.mxu0 0
        %372 = vmatpush2.bf16.xpose.msra.mxu0 0
        %373 = vmatprep.subr.bf16.mxu0 0
        %374 = vmatpush2.bf16.xpose.msra.mxu0 0
        %375 = vmatprep.subr.bf16.mxu0 0
        %376 = vmatpush2.bf16.xpose.msra.mxu0 0
        %377 = vmatprep.subr.bf16.mxu0 0
        %378 = vmatpush2.bf16.xpose.msra.mxu0 0
        %379 = vmatprep.subr.bf16.mxu0 0
        %380 = vmatpush2.bf16.xpose.msra.mxu0 0
        %381 = vmatprep.subr.bf16.mxu0 0
        %382 = vmatpush2.bf16.xpose.msra.mxu0 0
        %383 = vmatprep.subr.bf16.mxu0 0
        %384 = vmatpush2.bf16.xpose.msra.mxu0 0
        %385 = vmatprep.subr.bf16.mxu0 0
        %386 = vmatpush2.bf16.xpose.msra.mxu0 0
        %387 = vmatprep.mubr.bf16.mxu0 0
        %388 = vmatmul.mubr.bf16.gmra.mxu0 %v350
        %v389 = vpop.f32.mrf.mxu0
        %v390 = vadd.f32 0.0, %v389
        %v391 = vpop.f32.mrf.mxu0
        %v392 = vpop.f32.mrf.mxu0
        %v393 = vpop.f32.mrf.mxu0
        %394 = vdwg.mxu0
        %v395 = vsel %vm348, %v390, -inf
        %396 = vmax.xlane.f32.xlu0 %v395
        %v397 = vpop.xlane.xlu0 %396
        %v398 = vsub.f32 %v390, %v397
        %v399 = vmul.f32 %v398, 1.442695
        %v400 = vpow.pop %v399
        %v401 = vsel %vm348, %v400, 0.0
        %402 = vadd.xlane.f32.xlu0 %v401
        %v403 = vpop.xlane.xlu0 %402
        %v404 = vrcp.pop %v403
        %v405 = vmul.f32 %v400, %v404
        %v406 = vpack.c.bf16 %v405, %v405
        %407 = vrot.lane.b32.xlu0 %v344, 64
        %v408 = vpop.permute.xlu0 %407
        %v410 = vsel %vm348, %v406, 0
        %vm412 = vcmask 1043456
        %v414 = vsel %vm412, %v408, 0
        %416 = vmatprep.subr.bf16.mxu0 0
        %417 = vmatpush1.bf16.msra.mxu0 0
        %418 = vmatprep.subr.bf16.mxu0 0
        %419 = vmatpush1.bf16.msra.mxu0 0
        %420 = vmatprep.subr.bf16.mxu0 0
        %421 = vmatpush1.bf16.msra.mxu0 0
        %422 = vmatprep.subr.bf16.mxu0 0
        %423 = vmatpush1.bf16.msra.mxu0 0
        %424 = vmatprep.subr.bf16.mxu0 0
        %425 = vmatpush1.bf16.msra.mxu0 0
        %426 = vmatprep.subr.bf16.mxu0 0
        %427 = vmatpush1.bf16.msra.mxu0 0
        %428 = vmatprep.subr.bf16.mxu0 0
        %429 = vmatpush1.bf16.msra.mxu0 0
        %430 = vmatprep.subr.bf16.mxu0 0
        %431 = vmatpush1.bf16.msra.mxu0 %v414
        %432 = vmatprep.subr.bf16.mxu0 0
        %433 = vmatpush2.bf16.msra.mxu0 0
        %434 = vmatprep.subr.bf16.mxu0 0
        %435 = vmatpush2.bf16.msra.mxu0 0
        %436 = vmatprep.subr.bf16.mxu0 0
        %437 = vmatpush2.bf16.msra.mxu0 0
        %438 = vmatprep.subr.bf16.mxu0 0
        %439 = vmatpush2.bf16.msra.mxu0 0
        %440 = vmatprep.subr.bf16.mxu0 0
        %441 = vmatpush2.bf16.msra.mxu0 0
        %442 = vmatprep.subr.bf16.mxu0 0
        %443 = vmatpush2.bf16.msra.mxu0 0
        %444 = vmatprep.subr.bf16.mxu0 0
        %445 = vmatpush2.bf16.msra.mxu0 0
        %446 = vmatprep.subr.bf16.mxu0 0
        %447 = vmatpush2.bf16.msra.mxu0 0
        %448 = vmatprep.mubr.bf16.mxu0 0
        %449 = vmatmul.mubr.bf16.gmra.mxu0 %v410
        %v450 = vpop.f32.mrf.mxu0
        %v451 = vadd.f32 0.0, %v450
        %v452 = vpop.f32.mrf.mxu0
        %v453 = vpop.f32.mrf.mxu0
        %v454 = vpop.f32.mrf.mxu0
        %455 = vdwg.mxu0
        %v456 = vld [vmem:[#allocation3] sm:$0xff]
        %v457 = vpack.c.bf16 %v451, %v451
        %v458 = vld [vmem:[#allocation9] sm:$0xf]
        %v460 = vsel %vm348, %v457, 0
        %v463 = vsel %vm412, %v458, 0
        %465 = vmatprep.subr.bf16.mxu0 0
        %466 = vmatpush1.bf16.msra.mxu0 0
        %467 = vmatprep.subr.bf16.mxu0 0
        %468 = vmatpush1.bf16.msra.mxu0 0
        %469 = vmatprep.subr.bf16.mxu0 0
        %470 = vmatpush1.bf16.msra.mxu0 0
        %471 = vmatprep.subr.bf16.mxu0 0
        %472 = vmatpush1.bf16.msra.mxu0 0
        %473 = vmatprep.subr.bf16.mxu0 0
        %474 = vmatpush1.bf16.msra.mxu0 0
        %475 = vmatprep.subr.bf16.mxu0 0
        %476 = vmatpush1.bf16.msra.mxu0 0
        %477 = vmatprep.subr.bf16.mxu0 0
        %478 = vmatpush1.bf16.msra.mxu0 0
        %479 = vmatprep.subr.bf16.mxu0 0
        %480 = vmatpush1.bf16.msra.mxu0 %v463
        %481 = vmatprep.subr.bf16.mxu0 0
        %482 = vmatpush2.bf16.msra.mxu0 0
        %483 = vmatprep.subr.bf16.mxu0 0
        %484 = vmatpush2.bf16.msra.mxu0 0
        %485 = vmatprep.subr.bf16.mxu0 0
        %486 = vmatpush2.bf16.msra.mxu0 0
        %487 = vmatprep.subr.bf16.mxu0 0
        %488 = vmatpush2.bf16.msra.mxu0 0
        %489 = vmatprep.subr.bf16.mxu0 0
        %490 = vmatpush2.bf16.msra.mxu0 0
        %491 = vmatprep.subr.bf16.mxu0 0
        %492 = vmatpush2.bf16.msra.mxu0 0
        %493 = vmatprep.subr.bf16.mxu0 0
        %494 = vmatpush2.bf16.msra.mxu0 0
        %495 = vmatprep.subr.bf16.mxu0 0
        %496 = vmatpush2.bf16.msra.mxu0 0
        %497 = vmatprep.mubr.bf16.mxu0 0
        %498 = vmatmul.mubr.bf16.gmra.mxu0 %v460
        %v499 = vpop.f32.mrf.mxu0
        %v500 = vadd.f32 0.0, %v499
        %v501 = vpop.f32.mrf.mxu0
        %v502 = vpop.f32.mrf.mxu0
        %v503 = vpop.f32.mrf.mxu0
        %504 = vdwg.mxu0
        %v505 = vadd.f32 %v456, %v500
        %506 = vst.msk [vmem:[#allocation3] sm:$0xff] %vm294, %v505
        %v507 = vld [vmem:[#allocation2] sm:$0xff]
        %v508 = vmul.f32 %v507, 0.35355338
        %v509 = vpack.c.bf16 %v508, %v508
        %v510 = vpack.c.bf16 %v507, %v507
        %512 = vrot.lane.b32.xlu0 %v509, 120
        %v513 = vpop.permute.xlu0 %512
        %515 = vrot.lane.b32.xlu0 %v510, 88
        %v516 = vpop.permute.xlu0 %515
        %v518 = vsel %vm348, %v513, 0
        %v521 = vsel %vm348, %v516, 0
        %523 = vmatprep.subr.bf16.mxu0 0
        %524 = vmatpush1.bf16.xpose.msra.mxu0 0
        %525 = vmatprep.subr.bf16.mxu0 0
        %526 = vmatpush1.bf16.xpose.msra.mxu0 0
        %527 = vmatprep.subr.bf16.mxu0 0
        %528 = vmatpush1.bf16.xpose.msra.mxu0 0
        %529 = vmatprep.subr.bf16.mxu0 0
        %530 = vmatpush1.bf16.xpose.msra.mxu0 0
        %531 = vmatprep.subr.bf16.mxu0 0
        %532 = vmatpush1.bf16.xpose.msra.mxu0 0
        %533 = vmatprep.subr.bf16.mxu0 0
        %534 = vmatpush1.bf16.xpose.msra.mxu0 0
        %535 = vmatprep.subr.bf16.mxu0 0
        %536 = vmatpush1.bf16.xpose.msra.mxu0 0
        %537 = vmatprep.subr.bf16.mxu0 0
        %538 = vmatpush1.bf16.xpose.msra.mxu0 %v521
        %539 = vmatprep.subr.bf16.mxu0 0
        %540 = vmatpush2.bf16.xpose.msra.mxu0 0
        %541 = vmatprep.subr.bf16.mxu0 0
        %542 = vmatpush2.bf16.xpose.msra.mxu0 0
        %543 = vmatprep.subr.bf16.mxu0 0
        %544 = vmatpush2.bf16.xpose.msra.mxu0 0
        %545 = vmatprep.subr.bf16.mxu0 0
        %546 = vmatpush2.bf16.xpose.msra.mxu0 0
        %547 = vmatprep.subr.bf16.mxu0 0
        %548 = vmatpush2.bf16.xpose.msra.mxu0 0
        %549 = vmatprep.subr.bf16.mxu0 0
        %550 = vmatpush2.bf16.xpose.msra.mxu0 0
        %551 = vmatprep.subr.bf16.mxu0 0
        %552 = vmatpush2.bf16.xpose.msra.mxu0 0
        %553 = vmatprep.subr.bf16.mxu0 0
        %554 = vmatpush2.bf16.xpose.msra.mxu0 0
        %555 = vmatprep.mubr.bf16.mxu0 0
        %556 = vmatmul.mubr.bf16.gmra.mxu0 %v518
        %v557 = vpop.f32.mrf.mxu0
        %v558 = vadd.f32 0.0, %v557
        %v559 = vpop.f32.mrf.mxu0
        %v560 = vpop.f32.mrf.mxu0
        %v561 = vpop.f32.mrf.mxu0
        %562 = vdwg.mxu0
        %v563 = vsel %vm348, %v558, -inf
        %564 = vmax.xlane.f32.xlu0 %v563
        %v565 = vpop.xlane.xlu0 %564
        %v566 = vsub.f32 %v558, %v565
        %v567 = vmul.f32 %v566, 1.442695
        %v568 = vpow.pop %v567
        %v569 = vsel %vm348, %v568, 0.0
        %570 = vadd.xlane.f32.xlu0 %v569
        %v571 = vpop.xlane.xlu0 %570
        %v572 = vrcp.pop %v571
        %v573 = vmul.f32 %v568, %v572
        %v574 = vpack.c.bf16 %v573, %v573
        %575 = vrot.lane.b32.xlu0 %v510, 56
        %v576 = vpop.permute.xlu0 %575
        %v578 = vsel %vm348, %v574, 0
        %v581 = vsel %vm412, %v576, 0
        %583 = vmatprep.subr.bf16.mxu0 0
        %584 = vmatpush1.bf16.msra.mxu0 0
        %585 = vmatprep.subr.bf16.mxu0 0
        %586 = vmatpush1.bf16.msra.mxu0 0
        %587 = vmatprep.subr.bf16.mxu0 0
        %588 = vmatpush1.bf16.msra.mxu0 0
        %589 = vmatprep.subr.bf16.mxu0 0
        %590 = vmatpush1.bf16.msra.mxu0 0
        %591 = vmatprep.subr.bf16.mxu0 0
        %592 = vmatpush1.bf16.msra.mxu0 0
        %593 = vmatprep.subr.bf16.mxu0 0
        %594 = vmatpush1.bf16.msra.mxu0 0
        %595 = vmatprep.subr.bf16.mxu0 0
        %596 = vmatpush1.bf16.msra.mxu0 0
        %597 = vmatprep.subr.bf16.mxu0 0
        %598 = vmatpush1.bf16.msra.mxu0 %v581
        %599 = vmatprep.subr.bf16.mxu0 0
        %600 = vmatpush2.bf16.msra.mxu0 0
        %601 = vmatprep.subr.bf16.mxu0 0
        %602 = vmatpush2.bf16.msra.mxu0 0
        %603 = vmatprep.subr.bf16.mxu0 0
        %604 = vmatpush2.bf16.msra.mxu0 0
        %605 = vmatprep.subr.bf16.mxu0 0
        %606 = vmatpush2.bf16.msra.mxu0 0
        %607 = vmatprep.subr.bf16.mxu0 0
        %608 = vmatpush2.bf16.msra.mxu0 0
        %609 = vmatprep.subr.bf16.mxu0 0
        %610 = vmatpush2.bf16.msra.mxu0 0
        %611 = vmatprep.subr.bf16.mxu0 0
        %612 = vmatpush2.bf16.msra.mxu0 0
        %613 = vmatprep.subr.bf16.mxu0 0
        %614 = vmatpush2.bf16.msra.mxu0 0
        %615 = vmatprep.mubr.bf16.mxu0 0
        %616 = vmatmul.mubr.bf16.gmra.mxu0 %v578
        %v617 = vpop.f32.mrf.mxu0
        %v618 = vadd.f32 0.0, %v617
        %v619 = vpop.f32.mrf.mxu0
        %v620 = vpop.f32.mrf.mxu0
        %v621 = vpop.f32.mrf.mxu0
        %622 = vdwg.mxu0
        %v623 = vld [vmem:[#allocation3] sm:$0xff]
        %v624 = vpack.c.bf16 %v618, %v618
        %v625 = vld [vmem:[#allocation9 + $0x4] sm:$0xf]
        %v627 = vsel %vm348, %v624, 0
        %v630 = vsel %vm412, %v625, 0
        %632 = vmatprep.subr.bf16.mxu0 0
        %633 = vmatpush1.bf16.msra.mxu0 0
        %634 = vmatprep.subr.bf16.mxu0 0
        %635 = vmatpush1.bf16.msra.mxu0 0
        %636 = vmatprep.subr.bf16.mxu0 0
        %637 = vmatpush1.bf16.msra.mxu0 0
        %638 = vmatprep.subr.bf16.mxu0 0
        %639 = vmatpush1.bf16.msra.mxu0 0
        %640 = vmatprep.subr.bf16.mxu0 0
        %641 = vmatpush1.bf16.msra.mxu0 0
        %642 = vmatprep.subr.bf16.mxu0 0
        %643 = vmatpush1.bf16.msra.mxu0 0
        %644 = vmatprep.subr.bf16.mxu0 0
        %645 = vmatpush1.bf16.msra.mxu0 0
        %646 = vmatprep.subr.bf16.mxu0 0
        %647 = vmatpush1.bf16.msra.mxu0 %v630
        %648 = vmatprep.subr.bf16.mxu0 0
        %649 = vmatpush2.bf16.msra.mxu0 0
        %650 = vmatprep.subr.bf16.mxu0 0
        %651 = vmatpush2.bf16.msra.mxu0 0
        %652 = vmatprep.subr.bf16.mxu0 0
        %653 = vmatpush2.bf16.msra.mxu0 0
        %654 = vmatprep.subr.bf16.mxu0 0
        %655 = vmatpush2.bf16.msra.mxu0 0
        %656 = vmatprep.subr.bf16.mxu0 0
        %657 = vmatpush2.bf16.msra.mxu0 0
        %658 = vmatprep.subr.bf16.mxu0 0
        %659 = vmatpush2.bf16.msra.mxu0 0
        %660 = vmatprep.subr.bf16.mxu0 0
        %661 = vmatpush2.bf16.msra.mxu0 0
        %662 = vmatprep.subr.bf16.mxu0 0
        %663 = vmatpush2.bf16.msra.mxu0 0
        %664 = vmatprep.mubr.bf16.mxu0 0
        %665 = vmatmul.mubr.bf16.gmra.mxu0 %v627
        %v666 = vpop.f32.mrf.mxu0
        %v667 = vadd.f32 0.0, %v666
        %v668 = vpop.f32.mrf.mxu0
        %v669 = vpop.f32.mrf.mxu0
        %v670 = vpop.f32.mrf.mxu0
        %671 = vdwg.mxu0
        %v672 = vadd.f32 %v623, %v667
        %673 = vst.msk [vmem:[#allocation3] sm:$0xff] %vm294, %v672
        %v674 = vld [vmem:[#allocation2] sm:$0xff]
        %v675 = vmul.f32 %v674, 0.35355338
        %v676 = vpack.c.bf16 %v675, %v675
        %v677 = vpack.c.bf16 %v674, %v674
        %679 = vrot.lane.b32.xlu0 %v676, 112
        %v680 = vpop.permute.xlu0 %679
        %682 = vrot.lane.b32.xlu0 %v677, 80
        %v683 = vpop.permute.xlu0 %682
        %v685 = vsel %vm348, %v680, 0
        %v688 = vsel %vm348, %v683, 0
        %690 = vmatprep.subr.bf16.mxu0 0
        %691 = vmatpush1.bf16.xpose.msra.mxu0 0
        %692 = vmatprep.subr.bf16.mxu0 0
        %693 = vmatpush1.bf16.xpose.msra.mxu0 0
        %694 = vmatprep.subr.bf16.mxu0 0
        %695 = vmatpush1.bf16.xpose.msra.mxu0 0
        %696 = vmatprep.subr.bf16.mxu0 0
        %697 = vmatpush1.bf16.xpose.msra.mxu0 0
        %698 = vmatprep.subr.bf16.mxu0 0
        %699 = vmatpush1.bf16.xpose.msra.mxu0 0
        %700 = vmatprep.subr.bf16.mxu0 0
        %701 = vmatpush1.bf16.xpose.msra.mxu0 0
        %702 = vmatprep.subr.bf16.mxu0 0
        %703 = vmatpush1.bf16.xpose.msra.mxu0 0
        %704 = vmatprep.subr.bf16.mxu0 0
        %705 = vmatpush1.bf16.xpose.msra.mxu0 %v688
        %706 = vmatprep.subr.bf16.mxu0 0
        %707 = vmatpush2.bf16.xpose.msra.mxu0 0
        %708 = vmatprep.subr.bf16.mxu0 0
        %709 = vmatpush2.bf16.xpose.msra.mxu0 0
        %710 = vmatprep.subr.bf16.mxu0 0
        %711 = vmatpush2.bf16.xpose.msra.mxu0 0
        %712 = vmatprep.subr.bf16.mxu0 0
        %713 = vmatpush2.bf16.xpose.msra.mxu0 0
        %714 = vmatprep.subr.bf16.mxu0 0
        %715 = vmatpush2.bf16.xpose.msra.mxu0 0
        %716 = vmatprep.subr.bf16.mxu0 0
        %717 = vmatpush2.bf16.xpose.msra.mxu0 0
        %718 = vmatprep.subr.bf16.mxu0 0
        %719 = vmatpush2.bf16.xpose.msra.mxu0 0
        %720 = vmatprep.subr.bf16.mxu0 0
        %721 = vmatpush2.bf16.xpose.msra.mxu0 0
        %722 = vmatprep.mubr.bf16.mxu0 0
        %723 = vmatmul.mubr.bf16.gmra.mxu0 %v685
        %v724 = vpop.f32.mrf.mxu0
        %v725 = vadd.f32 0.0, %v724
        %v726 = vpop.f32.mrf.mxu0
        %v727 = vpop.f32.mrf.mxu0
        %v728 = vpop.f32.mrf.mxu0
        %729 = vdwg.mxu0
        %v730 = vsel %vm348, %v725, -inf
        %731 = vmax.xlane.f32.xlu0 %v730
        %v732 = vpop.xlane.xlu0 %731
        %v733 = vsub.f32 %v725, %v732
        %v734 = vmul.f32 %v733, 1.442695
        %v735 = vpow.pop %v734
        %v736 = vsel %vm348, %v735, 0.0
        %737 = vadd.xlane.f32.xlu0 %v736
        %v738 = vpop.xlane.xlu0 %737
        %v739 = vrcp.pop %v738
        %v740 = vmul.f32 %v735, %v739
        %v741 = vpack.c.bf16 %v740, %v740
        %742 = vrot.lane.b32.xlu0 %v677, 48
        %v743 = vpop.permute.xlu0 %742
        %v745 = vsel %vm348, %v741, 0
        %v748 = vsel %vm412, %v743, 0
        %750 = vmatprep.subr.bf16.mxu0 0
        %751 = vmatpush1.bf16.msra.mxu0 0
        %752 = vmatprep.subr.bf16.mxu0 0
        %753 = vmatpush1.bf16.msra.mxu0 0
        %754 = vmatprep.subr.bf16.mxu0 0
        %755 = vmatpush1.bf16.msra.mxu0 0
        %756 = vmatprep.subr.bf16.mxu0 0
        %757 = vmatpush1.bf16.msra.mxu0 0
        %758 = vmatprep.subr.bf16.mxu0 0
        %759 = vmatpush1.bf16.msra.mxu0 0
        %760 = vmatprep.subr.bf16.mxu0 0
        %761 = vmatpush1.bf16.msra.mxu0 0
        %762 = vmatprep.subr.bf16.mxu0 0
        %763 = vmatpush1.bf16.msra.mxu0 0
        %764 = vmatprep.subr.bf16.mxu0 0
        %765 = vmatpush1.bf16.msra.mxu0 %v748
        %766 = vmatprep.subr.bf16.mxu0 0
        %767 = vmatpush2.bf16.msra.mxu0 0
        %768 = vmatprep.subr.bf16.mxu0 0
        %769 = vmatpush2.bf16.msra.mxu0 0
        %770 = vmatprep.subr.bf16.mxu0 0
        %771 = vmatpush2.bf16.msra.mxu0 0
        %772 = vmatprep.subr.bf16.mxu0 0
        %773 = vmatpush2.bf16.msra.mxu0 0
        %774 = vmatprep.subr.bf16.mxu0 0
        %775 = vmatpush2.bf16.msra.mxu0 0
        %776 = vmatprep.subr.bf16.mxu0 0
        %777 = vmatpush2.bf16.msra.mxu0 0
        %778 = vmatprep.subr.bf16.mxu0 0
        %779 = vmatpush2.bf16.msra.mxu0 0
        %780 = vmatprep.subr.bf16.mxu0 0
        %781 = vmatpush2.bf16.msra.mxu0 0
        %782 = vmatprep.mubr.bf16.mxu0 0
        %783 = vmatmul.mubr.bf16.gmra.mxu0 %v745
        %v784 = vpop.f32.mrf.mxu0
        %v785 = vadd.f32 0.0, %v784
        %v786 = vpop.f32.mrf.mxu0
        %v787 = vpop.f32.mrf.mxu0
        %v788 = vpop.f32.mrf.mxu0
        %789 = vdwg.mxu0
        %v790 = vld [vmem:[#allocation3] sm:$0xff]
        %v791 = vpack.c.bf16 %v785, %v785
        %v792 = vld [vmem:[#allocation9 + $0x8] sm:$0xf]
        %v794 = vsel %vm348, %v791, 0
        %v797 = vsel %vm412, %v792, 0
        %799 = vmatprep.subr.bf16.mxu0 0
        %800 = vmatpush1.bf16.msra.mxu0 0
        %801 = vmatprep.subr.bf16.mxu0 0
        %802 = vmatpush1.bf16.msra.mxu0 0
        %803 = vmatprep.subr.bf16.mxu0 0
        %804 = vmatpush1.bf16.msra.mxu0 0
        %805 = vmatprep.subr.bf16.mxu0 0
        %806 = vmatpush1.bf16.msra.mxu0 0
        %807 = vmatprep.subr.bf16.mxu0 0
        %808 = vmatpush1.bf16.msra.mxu0 0
        %809 = vmatprep.subr.bf16.mxu0 0
        %810 = vmatpush1.bf16.msra.mxu0 0
        %811 = vmatprep.subr.bf16.mxu0 0
        %812 = vmatpush1.bf16.msra.mxu0 0
        %813 = vmatprep.subr.bf16.mxu0 0
        %814 = vmatpush1.bf16.msra.mxu0 %v797
        %815 = vmatprep.subr.bf16.mxu0 0
        %816 = vmatpush2.bf16.msra.mxu0 0
        %817 = vmatprep.subr.bf16.mxu0 0
        %818 = vmatpush2.bf16.msra.mxu0 0
        %819 = vmatprep.subr.bf16.mxu0 0
        %820 = vmatpush2.bf16.msra.mxu0 0
        %821 = vmatprep.subr.bf16.mxu0 0
        %822 = vmatpush2.bf16.msra.mxu0 0
        %823 = vmatprep.subr.bf16.mxu0 0
        %824 = vmatpush2.bf16.msra.mxu0 0
        %825 = vmatprep.subr.bf16.mxu0 0
        %826 = vmatpush2.bf16.msra.mxu0 0
        %827 = vmatprep.subr.bf16.mxu0 0
        %828 = vmatpush2.bf16.msra.mxu0 0
        %829 = vmatprep.subr.bf16.mxu0 0
        %830 = vmatpush2.bf16.msra.mxu0 0
        %831 = vmatprep.mubr.bf16.mxu0 0
        %832 = vmatmul.mubr.bf16.gmra.mxu0 %v794
        %v833 = vpop.f32.mrf.mxu0
        %v834 = vadd.f32 0.0, %v833
        %v835 = vpop.f32.mrf.mxu0
        %v836 = vpop.f32.mrf.mxu0
        %v837 = vpop.f32.mrf.mxu0
        %838 = vdwg.mxu0
        %v839 = vadd.f32 %v790, %v834
        %840 = vst.msk [vmem:[#allocation3] sm:$0xff] %vm294, %v839
        %v841 = vld [vmem:[#allocation2] sm:$0xff]
        %v842 = vmul.f32 %v841, 0.35355338
        %v843 = vpack.c.bf16 %v842, %v842
        %v844 = vpack.c.bf16 %v841, %v841
        %846 = vrot.lane.b32.xlu0 %v843, 104
        %v847 = vpop.permute.xlu0 %846
        %849 = vrot.lane.b32.xlu0 %v844, 72
        %v850 = vpop.permute.xlu0 %849
        %v852 = vsel %vm348, %v847, 0
        %v855 = vsel %vm348, %v850, 0
        %857 = vmatprep.subr.bf16.mxu0 0
        %858 = vmatpush1.bf16.xpose.msra.mxu0 0
        %859 = vmatprep.subr.bf16.mxu0 0
        %860 = vmatpush1.bf16.xpose.msra.mxu0 0
        %861 = vmatprep.subr.bf16.mxu0 0
        %862 = vmatpush1.bf16.xpose.msra.mxu0 0
        %863 = vmatprep.subr.bf16.mxu0 0
        %864 = vmatpush1.bf16.xpose.msra.mxu0 0
        %865 = vmatprep.subr.bf16.mxu0 0
        %866 = vmatpush1.bf16.xpose.msra.mxu0 0
        %867 = vmatprep.subr.bf16.mxu0 0
        %868 = vmatpush1.bf16.xpose.msra.mxu0 0
        %869 = vmatprep.subr.bf16.mxu0 0
        %870 = vmatpush1.bf16.xpose.msra.mxu0 0
        %871 = vmatprep.subr.bf16.mxu0 0
        %872 = vmatpush1.bf16.xpose.msra.mxu0 %v855
        %873 = vmatprep.subr.bf16.mxu0 0
        %874 = vmatpush2.bf16.xpose.msra.mxu0 0
        %875 = vmatprep.subr.bf16.mxu0 0
        %876 = vmatpush2.bf16.xpose.msra.mxu0 0
        %877 = vmatprep.subr.bf16.mxu0 0
        %878 = vmatpush2.bf16.xpose.msra.mxu0 0
        %879 = vmatprep.subr.bf16.mxu0 0
        %880 = vmatpush2.bf16.xpose.msra.mxu0 0
        %881 = vmatprep.subr.bf16.mxu0 0
        %882 = vmatpush2.bf16.xpose.msra.mxu0 0
        %883 = vmatprep.subr.bf16.mxu0 0
        %884 = vmatpush2.bf16.xpose.msra.mxu0 0
        %885 = vmatprep.subr.bf16.mxu0 0
        %886 = vmatpush2.bf16.xpose.msra.mxu0 0
        %887 = vmatprep.subr.bf16.mxu0 0
        %888 = vmatpush2.bf16.xpose.msra.mxu0 0
        %889 = vmatprep.mubr.bf16.mxu0 0
        %890 = vmatmul.mubr.bf16.gmra.mxu0 %v852
        %v891 = vpop.f32.mrf.mxu0
        %v892 = vadd.f32 0.0, %v891
        %v893 = vpop.f32.mrf.mxu0
        %v894 = vpop.f32.mrf.mxu0
        %v895 = vpop.f32.mrf.mxu0
        %896 = vdwg.mxu0
        %v897 = vsel %vm348, %v892, -inf
        %898 = vmax.xlane.f32.xlu0 %v897
        %v899 = vpop.xlane.xlu0 %898
        %v900 = vsub.f32 %v892, %v899
        %v901 = vmul.f32 %v900, 1.442695
        %v902 = vpow.pop %v901
        %v903 = vsel %vm348, %v902, 0.0
        %904 = vadd.xlane.f32.xlu0 %v903
        %v905 = vpop.xlane.xlu0 %904
        %v906 = vrcp.pop %v905
        %v907 = vmul.f32 %v902, %v906
        %v908 = vpack.c.bf16 %v907, %v907
        %909 = vrot.lane.b32.xlu0 %v844, 40
        %v910 = vpop.permute.xlu0 %909
        %v912 = vsel %vm348, %v908, 0
        %v915 = vsel %vm412, %v910, 0
        %917 = vmatprep.subr.bf16.mxu0 0
        %918 = vmatpush1.bf16.msra.mxu0 0
        %919 = vmatprep.subr.bf16.mxu0 0
        %920 = vmatpush1.bf16.msra.mxu0 0
        %921 = vmatprep.subr.bf16.mxu0 0
        %922 = vmatpush1.bf16.msra.mxu0 0
        %923 = vmatprep.subr.bf16.mxu0 0
        %924 = vmatpush1.bf16.msra.mxu0 0
        %925 = vmatprep.subr.bf16.mxu0 0
        %926 = vmatpush1.bf16.msra.mxu0 0
        %927 = vmatprep.subr.bf16.mxu0 0
        %928 = vmatpush1.bf16.msra.mxu0 0
        %929 = vmatprep.subr.bf16.mxu0 0
        %930 = vmatpush1.bf16.msra.mxu0 0
        %931 = vmatprep.subr.bf16.mxu0 0
        %932 = vmatpush1.bf16.msra.mxu0 %v915
        %933 = vmatprep.subr.bf16.mxu0 0
        %934 = vmatpush2.bf16.msra.mxu0 0
        %935 = vmatprep.subr.bf16.mxu0 0
        %936 = vmatpush2.bf16.msra.mxu0 0
        %937 = vmatprep.subr.bf16.mxu0 0
        %938 = vmatpush2.bf16.msra.mxu0 0
        %939 = vmatprep.subr.bf16.mxu0 0
        %940 = vmatpush2.bf16.msra.mxu0 0
        %941 = vmatprep.subr.bf16.mxu0 0
        %942 = vmatpush2.bf16.msra.mxu0 0
        %943 = vmatprep.subr.bf16.mxu0 0
        %944 = vmatpush2.bf16.msra.mxu0 0
        %945 = vmatprep.subr.bf16.mxu0 0
        %946 = vmatpush2.bf16.msra.mxu0 0
        %947 = vmatprep.subr.bf16.mxu0 0
        %948 = vmatpush2.bf16.msra.mxu0 0
        %949 = vmatprep.mubr.bf16.mxu0 0
        %950 = vmatmul.mubr.bf16.gmra.mxu0 %v912
        %v951 = vpop.f32.mrf.mxu0
        %v952 = vadd.f32 0.0, %v951
        %v953 = vpop.f32.mrf.mxu0
        %v954 = vpop.f32.mrf.mxu0
        %v955 = vpop.f32.mrf.mxu0
        %956 = vdwg.mxu0
        %v957 = vld [vmem:[#allocation3] sm:$0xff]
        %v958 = vpack.c.bf16 %v952, %v952
        %v959 = vld [vmem:[#allocation9 + $0xc] sm:$0xf]
        %v961 = vsel %vm348, %v958, 0
        %v964 = vsel %vm412, %v959, 0
        %966 = vmatprep.subr.bf16.mxu0 0
        %967 = vmatpush1.bf16.msra.mxu0 0
        %968 = vmatprep.subr.bf16.mxu0 0
        %969 = vmatpush1.bf16.msra.mxu0 0
        %970 = vmatprep.subr.bf16.mxu0 0
        %971 = vmatpush1.bf16.msra.mxu0 0
        %972 = vmatprep.subr.bf16.mxu0 0
        %973 = vmatpush1.bf16.msra.mxu0 0
        %974 = vmatprep.subr.bf16.mxu0 0
        %975 = vmatpush1.bf16.msra.mxu0 0
        %976 = vmatprep.subr.bf16.mxu0 0
        %977 = vmatpush1.bf16.msra.mxu0 0
        %978 = vmatprep.subr.bf16.mxu0 0
        %979 = vmatpush1.bf16.msra.mxu0 0
        %980 = vmatprep.subr.bf16.mxu0 0
        %981 = vmatpush1.bf16.msra.mxu0 %v964
        %982 = vmatprep.subr.bf16.mxu0 0
        %983 = vmatpush2.bf16.msra.mxu0 0
        %984 = vmatprep.subr.bf16.mxu0 0
        %985 = vmatpush2.bf16.msra.mxu0 0
        %986 = vmatprep.subr.bf16.mxu0 0
        %987 = vmatpush2.bf16.msra.mxu0 0
        %988 = vmatprep.subr.bf16.mxu0 0
        %989 = vmatpush2.bf16.msra.mxu0 0
        %990 = vmatprep.subr.bf16.mxu0 0
        %991 = vmatpush2.bf16.msra.mxu0 0
        %992 = vmatprep.subr.bf16.mxu0 0
        %993 = vmatpush2.bf16.msra.mxu0 0
        %994 = vmatprep.subr.bf16.mxu0 0
        %995 = vmatpush2.bf16.msra.mxu0 0
        %996 = vmatprep.subr.bf16.mxu0 0
        %997 = vmatpush2.bf16.msra.mxu0 0
        %998 = vmatprep.mubr.bf16.mxu0 0
        %999 = vmatmul.mubr.bf16.gmra.mxu0 %v961
        %v1000 = vpop.f32.mrf.mxu0
        %v1001 = vadd.f32 0.0, %v1000
        %v1002 = vpop.f32.mrf.mxu0
        %v1003 = vpop.f32.mrf.mxu0
        %v1004 = vpop.f32.mrf.mxu0
        %1005 = vdwg.mxu0
        %v1006 = vadd.f32 %v957, %v1001
        %1007 = vst.msk [vmem:[#allocation3] sm:$0xff] %vm294, %v1006
        %v1008 = vld [vmem:[#allocation3] sm:$0xff]
        %v1009 = vld [vmem:[%s4] sm:$0x1]
        %v1011 = vlaneseq
        %v1012 = vshrl.u32 %v1011, 7
        %v1013 = vsub.s32 0, %v1012
        %v1014 = vrot.slane %v1009, %v1013
        %v1016 = vadd.f32 %v1008, %v1014
        %1017 = vst.msk [vmem:[%s268] sm:$0xff] %vm294, %v1016
        %s1018 = sand.u32 %s141, 1
        %s1019 = scalar_lea.sflag [#allocation6], %s1018
        %s1020 = sand.u32 %s141, 1
        %s1021 = smul.addr %s1020, 8
        %s1022 = scalar_lea.vmem [#allocation10], %s1021
        // Predicated region
        $region53: #{tpu_custom_call.1} parent=39 // pred_check
          %p1023 = pneg %p151
        $region54: #{tpu_custom_call.1} parent=39 // pred_check_branch
          %1025 = sbr.rel (%p1023) target = $region56
        $region55: #{tpu_custom_call.1} parent=39 // pred_region
          %s1027 = ssub.s32 128, 128
          %1028 = vsyncadd %s1019, %s1027
          %s1029 = smul.addr %s23, 128
          %s1030 = scalar_lea.hbm %s5, %s1029
          %s1032 = sshll.u32 %s1022, 4
          %s1033 = int_to_ptr.vmem [resolvable:$true] %s1032
          %1035 = dma.vmem_to_hbm [thread:$0]  %s1033, 128, %s1030, %s1019
        $region56: #{tpu_custom_call.1} parent=39 // pred_fallthru
          _
      $region40: #{tpu_custom_call.1} parent=5 // pred_fallthru
        _
      %p1036 = scmp.le.s32.totalorder 2, %s18
      // Predicated region
      $region57: #{tpu_custom_call.1} parent=5 // pred_check
        %p1037 = pneg %p1036
      $region58: #{tpu_custom_call.1} parent=5 // pred_check_branch
        %1039 = sbr.rel (%p1037) target = $region60
      $region59: #{tpu_custom_call.1} parent=5 // pred_region
        %s1040 = ssub.s32 %s18, 2
        // Predicated region
        $region61: #{tpu_custom_call.1} parent=59 // pred_check
          %p1041 = pneg %p157
        $region62: #{tpu_custom_call.1} parent=59 // pred_check_branch
          %1043 = sbr.rel (%p1041) target = $region64
        $region63: #{tpu_custom_call.1} parent=59 // pred_region
          %s1044 = sand.u32 %s142, 1
          %s1045 = scalar_lea.sflag [#allocation6], %s1044
          %s1046 = sand.u32 %s142, 1
          %s1047 = smul.addr %s1046, 8
          %s1048 = scalar_lea.vmem [#allocation10], %s1047
          %1049 = dma.done %s1045, 128
        $region64: #{tpu_custom_call.1} parent=59 // pred_fallthru
          _
      $region60: #{tpu_custom_call.1} parent=5 // pred_fallthru
        _
    $region6: #{tpu_custom_call.1} parent=1 // loop_footer
      %s22 = sadd.s32 1, %s18
    $region7: #{tpu_custom_call.1} parent=1 // loop_footer_branch
      %17 = sbr.rel target = $region3
    $region8: #{tpu_custom_call.1} parent=1 // loop_exit
      _
    %1050 = vsyncpa [#allocation5], 1
    %s1051 = scalar_lea.sflag [#allocation5], 1
    %1052 = vsyncpa %s1051, 1
    %1053 = vsyncpa [#allocation8], 1
    %1054 = vsyncpa [#allocation6], 1
    %s1055 = scalar_lea.sflag [#allocation6], 1
    %1056 = vsyncpa %s1055, 1

</llo_original>
